<compile_context>
chip_gen: v7x
topology: tpu7x:2x2x1
jax: 0.10.0
libtpu: 0.0.40
codegen_flags: <defaults>
</compile_context>

<pallas_src>
import math
from functools import partial

import jax
import jax.numpy as jnp
from jax import lax
from jax.experimental import pallas as pl
from jax.experimental.pallas import tpu as pltpu


# ----------------------------------------------------------------------------
# Prologue: hoisted K/V projection (computed once per token, not per q tile).
# ----------------------------------------------------------------------------
def _kv_project_kernel(x_ref, wkv_ref, k_ref, v_ref):
    """x_ref: (1, C, TB) bf16, wkv_ref: (2D, C) bf16 -> k_ref/v_ref (1, D, TB) bf16."""
    D = k_ref.shape[1]
    kv = jnp.dot(wkv_ref[...], x_ref[0],
                 preferred_element_type=jnp.float32)          # (2D, TB)
    k_ref[0] = kv[0:D, :].astype(k_ref.dtype)
    v_ref[0] = kv[D:2 * D, :].astype(v_ref.dtype)


def _project_kv(x_cf, wkv_cf, *, block):
    """x_cf: (B, C, N) bf16, wkv_cf: (2D, C) bf16 -> (K, V) each (B, D, N) bf16."""
    B, C, N = x_cf.shape
    D = wkv_cf.shape[0] // 2
    grid = (B, N // block)
    return pl.pallas_call(
        _kv_project_kernel,
        out_shape=(jax.ShapeDtypeStruct((B, D, N), jnp.bfloat16),
                   jax.ShapeDtypeStruct((B, D, N), jnp.bfloat16)),
        grid_spec=pltpu.PrefetchScalarGridSpec(
            num_scalar_prefetch=0,
            grid=grid,
            in_specs=[
                pl.BlockSpec((1, C, block), lambda b, t: (b, 0, t)),
                pl.BlockSpec((2 * D, C), lambda b, t: (0, 0)),
            ],
            out_specs=[
                pl.BlockSpec((1, D, block), lambda b, t: (b, 0, t)),
                pl.BlockSpec((1, D, block), lambda b, t: (b, 0, t)),
            ],
        ),
        compiler_params=pltpu.CompilerParams(
            dimension_semantics=("parallel", "parallel")),
        cost_estimate=pl.CostEstimate(
            flops=int(2 * B * 2 * D * C * N),
            transcendentals=0,
            bytes_accessed=int(B * C * N * 2 + 2 * D * C * 2 + 2 * B * D * N * 2),
        ),
    )(x_cf, wkv_cf)


# ----------------------------------------------------------------------------
# Main flash-attention kernel (query projection fused at ki==0).
# ----------------------------------------------------------------------------
def _flash_loftr_kernel(xq_ref, k_ref, v_ref, mb_ref, mq_ref, wq_ref, wc_ref,
                        feat_ref, conf_ref,
                        q_scr, m_scr, l_scr, acc_scr):
    """Masked flash attention + confidence head.

    Grid: (batch, q_tile, kv_tile), kv_tile innermost ("arbitrary").

    xq_ref  : (1, C, TQ)  bf16  query-side tokens (channel-first, lane-dense)
    k_ref   : (1, D, TK)  bf16  pre-projected keys
    v_ref   : (1, D, TK)  bf16  pre-projected values
    mb_ref  : (1, 1, TK)  f32   additive key-mask bias (0 valid / -1e9 invalid)
    mq_ref  : (1, 1, TQ)  f32   query validity mask (1 / 0)
    wq_ref  : (D, C)      bf16  Wq^T, pre-scaled by 1/sqrt(D)
    wc_ref  : (1, D)      f32   confidence head weight (row vector)
    feat_ref: (1, D, TQ)  bf16  output features (channel-first, lane-dense)
    conf_ref: (1, 1, TQ)  f32   output confidence (lane-dense)
    q_scr   : (D, TQ)     bf16  per-q-tile query activations (no transpose)
    m_scr   : (TQ, 1)     f32   running row max
    l_scr   : (TQ, 1)     f32   running row sum
    acc_scr : (TQ, D)     f32   running PV accumulator
    """
    ki = pl.program_id(2)

    @pl.when(ki == 0)
    def _init():
        # Fused 1x1-conv query projection; 1/sqrt(D) already folded into Wq.
        q = jnp.dot(wq_ref[...], xq_ref[0],
                    preferred_element_type=jnp.float32)          # (D, TQ)
        q_scr[...] = q.astype(q_scr.dtype)
        m_scr[...] = jnp.full(m_scr.shape, -jnp.inf, jnp.float32)
        l_scr[...] = jnp.zeros(l_scr.shape, jnp.float32)
        acc_scr[...] = jnp.zeros(acc_scr.shape, jnp.float32)

    k = k_ref[0]                                                 # (D, TK)
    v = v_ref[0]                                                 # (D, TK)

    # Scores: contract the leading D axes ("TN" form — MXU handles directly).
    s = lax.dot_general(q_scr[...], k, (((0,), (0,)), ((), ())),
                        preferred_element_type=jnp.float32)      # (TQ, TK)
    s = s + mb_ref[0]                                            # key-mask bias

    # Online (flash) softmax update; stats kept in f32.
    m_prev = m_scr[...]
    m_new = jnp.maximum(m_prev, jnp.max(s, axis=-1, keepdims=True))  # (TQ, 1)
    alpha = jnp.exp(m_prev - m_new)                                  # (TQ, 1)
    p = jnp.exp(s - m_new)                                           # (TQ, TK)
    l_scr[...] = alpha * l_scr[...] + jnp.sum(p, axis=-1, keepdims=True)
    # PV: p @ v^T via the "NT" dot_general (contract last with last).
    acc_scr[...] = alpha * acc_scr[...] + lax.dot_general(
        p.astype(jnp.bfloat16), v, (((1,), (1,)), ((), ())),
        preferred_element_type=jnp.float32)                          # (TQ, D)
    m_scr[...] = m_new

    @pl.when(ki == pl.num_programs(2) - 1)
    def _finalize():
        mq = mq_ref[0]                                               # (1, TQ)
        # Exact division: runs once per q tile, feeds the confidence head.
        out = acc_scr[...] / jnp.maximum(l_scr[...], 1e-30)          # (TQ, D)
        out_t = jnp.transpose(out) * mq                              # (D, TQ)
        feat_ref[0] = out_t.astype(feat_ref.dtype)
        logits = jnp.dot(wc_ref[...], out_t,
                         preferred_element_type=jnp.float32)         # (1, TQ)
        conf_ref[0] = (jax.nn.sigmoid(logits) * mq).astype(conf_ref.dtype)


def _loftr_forward(params, x, mask, x2=None, masksup=None, *,
                   q_block=256, k_block=256,
                   vmem_limit_bytes=48 * 1024 * 1024):
    """Single-view LoFTR-style forward.  x: [B, C, H, W] f32, mask: [B, H, W]."""
    # TODO(synk): two-view path (x2 / masksup) of the original model is not
    #             reproduced here; only the single-view branch is implemented.
    del x2, masksup

    wq, wk, wv, wc = params
    B, C, H, W = x.shape
    N = H * W
    D = wq.shape[1]

    # Channel-first tokens: pure reshape of NCHW, N (=H*W) on the lane axis.
    x_cf = x.reshape(B, C, N)
    m_row = mask.reshape(B, 1, N).astype(jnp.float32)

    # Pad token axis so both block sizes divide it (padded tokens are masked).
    blk = math.lcm(q_block, k_block)
    n_pad = pl.cdiv(N, blk) * blk
    if n_pad != N:
        x_cf = jnp.pad(x_cf, ((0, 0), (0, 0), (0, n_pad - N)))
        m_row = jnp.pad(m_row, ((0, 0), (0, 0), (0, n_pad - N)))

    x_cf = x_cf.astype(jnp.bfloat16)
    m_bias = (m_row - 1.0) * 1e9          # additive key-mask bias, computed once

    # Channel-first projection weights; fold 1/sqrt(D) into Wq.
    scale = 1.0 / math.sqrt(D)
    wq_cf = (wq * scale).T.astype(jnp.bfloat16)                      # (D, C)
    wkv_cf = jnp.concatenate([wk, wv], axis=1).T.astype(jnp.bfloat16)  # (2D, C)
    wc_row = wc.reshape(1, D).astype(jnp.float32)

    # Prologue: K/V projected once per token (hoisted out of the q-tile loop).
    k_cf, v_cf = _project_kv(x_cf, wkv_cf, block=k_block)

    n_q = n_pad // q_block
    n_k = n_pad // k_block
    grid = (B, n_q, n_k)

    grid_spec = pltpu.PrefetchScalarGridSpec(
        num_scalar_prefetch=0,
        grid=grid,
        in_specs=[
            pl.BlockSpec((1, C, q_block), lambda b, qi, ki: (b, 0, qi)),  # x (q side)
            pl.BlockSpec((1, D, k_block), lambda b, qi, ki: (b, 0, ki)),  # K
            pl.BlockSpec((1, D, k_block), lambda b, qi, ki: (b, 0, ki)),  # V
            pl.BlockSpec((1, 1, k_block), lambda b, qi, ki: (b, 0, ki)),  # key-mask bias
            pl.BlockSpec((1, 1, q_block), lambda b, qi, ki: (b, 0, qi)),  # query mask
            pl.BlockSpec((D, C), lambda b, qi, ki: (0, 0)),               # Wq (scaled)
            pl.BlockSpec((1, D), lambda b, qi, ki: (0, 0)),               # conf head
        ],
        out_specs=[
            pl.BlockSpec((1, D, q_block), lambda b, qi, ki: (b, 0, qi)),  # features
            pl.BlockSpec((1, 1, q_block), lambda b, qi, ki: (b, 0, qi)),  # confidence
        ],
        scratch_shapes=[
            pltpu.VMEM((D, q_block), jnp.bfloat16),   # q tile (channel-first)
            pltpu.VMEM((q_block, 1), jnp.float32),    # running max
            pltpu.VMEM((q_block, 1), jnp.float32),    # running sum
            pltpu.VMEM((q_block, D), jnp.float32),    # PV accumulator
        ],
    )

    cost = pl.CostEstimate(
        flops=int(2 * B * (D * C * n_pad            # q projection (once/token)
                           + 2 * D * n_pad * n_pad  # scores + PV
                           + D * n_pad)),           # confidence head
        transcendentals=int(B * (n_pad * n_pad + n_pad * n_k + n_pad)),
        bytes_accessed=int(B * C * n_pad * 2                 # x (q side)
                           + B * n_q * 2 * D * n_pad * 2     # K/V re-reads per q tile
                           + 2 * B * n_pad * 4               # masks
                           + (wq_cf.size * 2 + wc_row.size * 4)
                           + B * D * n_pad * 2               # bf16 feature writeback
                           + B * n_pad * 4),                 # confidence writeback
    )

    feat_cf, conf_row = pl.pallas_call(
        _flash_loftr_kernel,
        out_shape=(
            jax.ShapeDtypeStruct((B, D, n_pad), jnp.bfloat16),
            jax.ShapeDtypeStruct((B, 1, n_pad), jnp.float32),
        ),
        grid_spec=grid_spec,
        compiler_params=pltpu.CompilerParams(
            dimension_semantics=("parallel", "parallel", "arbitrary"),
            vmem_limit_bytes=vmem_limit_bytes,
        ),
        cost_estimate=cost,
    )(x_cf, k_cf, v_cf, m_bias, m_row, wq_cf, wc_row)

    # Back to the module's external layout: (B, N, D) features, (B, N, 1) conf.
    feats = jnp.transpose(feat_cf[:, :, :N], (0, 2, 1))
    conf = conf_row[:, 0, :N][..., None]
    return feats, conf


def _loftr_reference(params, x, mask):
    """Pure-JAX f32 reference of the same forward (for correctness checking)."""
    wq, wk, wv, wc = params
    B, C, H, W = x.shape
    N = H * W
    D = wq.shape[1]
    x_tok = jnp.transpose(x, (0, 2, 3, 1)).reshape(B, N, C).astype(jnp.float32)
    m = mask.reshape(B, N).astype(jnp.float32)
    q = jnp.einsum("bnc,cd->bnd", x_tok, wq) / math.sqrt(D)
    k = jnp.einsum("bnc,cd->bnd", x_tok, wk)
    v = jnp.einsum("bnc,cd->bnd", x_tok, wv)
    s = jnp.einsum("bqd,bkd->bqk", q, k) + (m[:, None, :] - 1.0) * 1e9
    p = jax.nn.softmax(s, axis=-1)
    out = jnp.einsum("bqk,bkd->bqd", p, v) * m[:, :, None]
    conf = jax.nn.sigmoid(jnp.einsum("bnd,de->bne", out, wc)) * m[:, :, None]
    return out, conf


class Wrapper:
    """JAX analogue of the PyTorch Wrapper: pure delegation to `loftr`."""

    def __init__(self, loftr):
        self.loftr = loftr

    def __call__(self, x, mask, x2=None, masksup=None):
        return self.loftr(x, mask, x2, masksup)


def make_params(key, c_in, d_hidden):
    k1, k2, k3, k4 = jax.random.split(key, 4)
    scale = 1.0 / math.sqrt(c_in)
    wq = jax.random.normal(k1, (c_in, d_hidden), jnp.float32) * scale
    wk = jax.random.normal(k2, (c_in, d_hidden), jnp.float32) * scale
    wv = jax.random.normal(k3, (c_in, d_hidden), jnp.float32) * scale
    wc = jax.random.normal(k4, (d_hidden, 1), jnp.float32) / math.sqrt(d_hidden)
    return (wq, wk, wv, wc)


if __name__ == "__main__":
    key = jax.random.PRNGKey(0)
    k_x, k_p = jax.random.split(key)

    # N = 32*32 = 1024 tokens -> (B, 4, 4) flash grid at the 256-wide tiles.
    B, C, H, W = 2, 4, 32, 32
    D = 32

    x = jax.random.normal(k_x, (B, C, H, W), jnp.float32)
    # Deterministic mask: mask out the last 8 columns of each image.
    col = jnp.arange(W)
    mask = jnp.broadcast_to((col < W - 8)[None, None, :], (B, H, W)).astype(jnp.float32)

    params = make_params(k_p, C, D)
    loftr = partial(_loftr_forward, params, q_block=256, k_block=256)
    model = Wrapper(loftr)

    feats, conf = model(x, mask)            # x2=None, masksup=None (single view)
    jax.block_until_ready(feats)
    jax.block_until_ready(conf)

    assert feats.shape == (B, H * W, D)
    assert conf.shape == (B, H * W, 1)
    assert bool(jnp.all(jnp.isfinite(feats.astype(jnp.float32))))
    assert bool(jnp.all((conf >= 0.0) & (conf <= 1.0)))

    # Numerical check against the pure-JAX f32 reference (bf16 MXU tolerance).
    feats_ref, conf_ref = _loftr_reference(params, x, mask)
    assert bool(jnp.allclose(feats.astype(jnp.float32), feats_ref,
                             atol=5e-2, rtol=5e-2)), (
        "feat max abs diff",
        float(jnp.max(jnp.abs(feats.astype(jnp.float32) - feats_ref))))
    assert bool(jnp.allclose(conf, conf_ref, atol=2e-2, rtol=2e-2)), (
        "conf max abs diff", float(jnp.max(jnp.abs(conf - conf_ref))))

    print("KERNEL_OK")
</pallas_src>

<mosaic_0001>
module attributes {stable_mosaic.version = 11 : i64} {
  func.func @_kv_project_kernel(%arg0: i32, %arg1: i32, %arg2: memref<1x4x256xbf16, #tpu.memory_space<vmem>>, %arg3: memref<64x4xbf16, #tpu.memory_space<vmem>>, %arg4: memref<1x32x256xbf16, #tpu.memory_space<vmem>>, %arg5: memref<1x32x256xbf16, #tpu.memory_space<vmem>>) attributes {dimension_semantics = [#tpu.dimension_semantics<parallel>, #tpu.dimension_semantics<parallel>], iteration_bounds = array<i64: 2, 4>, scalar_prefetch = 0 : i64, scratch_operands = 0 : i64, tpu.core_type = #tpu.core_type<tc>, window_params = [{transform_indices = @transform_0, window_bounds = array<i64: 1, 4, 256>}, {pipeline_mode = #tpu.pipeline_mode<synchronous>, transform_indices = @transform_1, window_bounds = array<i64: 64, 4>}, {transform_indices = @transform_2, window_bounds = array<i64: 1, 32, 256>}, {transform_indices = @transform_3, window_bounds = array<i64: 1, 32, 256>}]} {
    %c0 = arith.constant 0 : index
    %c0_0 = arith.constant 0 : index
    %0 = vector.load %arg3[%c0, %c0_0] : memref<64x4xbf16, #tpu.memory_space<vmem>>, vector<64x4xbf16>
    %c0_1 = arith.constant 0 : index
    %c0_2 = arith.constant 0 : index
    %c0_3 = arith.constant 0 : index
    %1 = vector.load %arg2[%c0_1, %c0_2, %c0_3] : memref<1x4x256xbf16, #tpu.memory_space<vmem>>, vector<1x4x256xbf16>
    %2 = vector.shape_cast %1 : vector<1x4x256xbf16> to vector<4x256xbf16>
    %cst = arith.constant dense<0.000000e+00> : vector<64x256xf32>
    %3 = tpu.matmul %0, %2, %cst {dimension_numbers = #tpu.dot_dimension_numbers<[1], [0], [0], [1], [0, 0, 1, 1], [], []>} : vector<64x4xbf16>, vector<4x256xbf16>, vector<64x256xf32> -> vector<64x256xf32>
    %4 = vector.extract_strided_slice %3 {offsets = [0, 0], sizes = [32, 256], strides = [1, 1]} : vector<64x256xf32> to vector<32x256xf32>
    %5 = arith.truncf %4 : vector<32x256xf32> to vector<32x256xbf16>
    %c0_4 = arith.constant 0 : index
    %c0_5 = arith.constant 0 : index
    %c0_6 = arith.constant 0 : index
    %6 = vector.load %arg4[%c0_4, %c0_5, %c0_6] : memref<1x32x256xbf16, #tpu.memory_space<vmem>>, vector<1x32x256xbf16>
    %7 = vector.shape_cast %6 : vector<1x32x256xbf16> to vector<32x256xbf16>
    %8 = vector.shape_cast %5 : vector<32x256xbf16> to vector<1x32x256xbf16>
    tpu.vector_store %arg4[%c0_4, %c0_5, %c0_6], %8 {strides = array<i32>} : memref<1x32x256xbf16, #tpu.memory_space<vmem>>, vector<1x32x256xbf16>,
    %9 = vector.extract_strided_slice %3 {offsets = [32, 0], sizes = [32, 256], strides = [1, 1]} : vector<64x256xf32> to vector<32x256xf32>
    %10 = arith.truncf %9 : vector<32x256xf32> to vector<32x256xbf16>
    %c0_7 = arith.constant 0 : index
    %c0_8 = arith.constant 0 : index
    %c0_9 = arith.constant 0 : index
    %11 = vector.load %arg5[%c0_7, %c0_8, %c0_9] : memref<1x32x256xbf16, #tpu.memory_space<vmem>>, vector<1x32x256xbf16>
    %12 = vector.shape_cast %11 : vector<1x32x256xbf16> to vector<32x256xbf16>
    %13 = vector.shape_cast %10 : vector<32x256xbf16> to vector<1x32x256xbf16>
    tpu.vector_store %arg5[%c0_7, %c0_8, %c0_9], %13 {strides = array<i32>} : memref<1x32x256xbf16, #tpu.memory_space<vmem>>, vector<1x32x256xbf16>,
    return
  }
  func.func @transform_0(%arg0: i32, %arg1: i32) -> (i32, i32, i32) {
    %c0_i32 = arith.constant 0 : i32
    %c0_i32_0 = arith.constant 0 : i32
    return %arg0, %c0_i32, %arg1 : i32, i32, i32
  }
  func.func @transform_1(%arg0: i32, %arg1: i32) -> (i32, i32) {
    %c0_i32 = arith.constant 0 : i32
    %c0_i32_0 = arith.constant 0 : i32
    %c0_i32_1 = arith.constant 0 : i32
    return %c0_i32, %c0_i32_0 : i32, i32
  }
  func.func @transform_2(%arg0: i32, %arg1: i32) -> (i32, i32, i32) {
    %c0_i32 = arith.constant 0 : i32
    %c0_i32_0 = arith.constant 0 : i32
    return %arg0, %c0_i32, %arg1 : i32, i32, i32
  }
  func.func @transform_3(%arg0: i32, %arg1: i32) -> (i32, i32, i32) {
    %c0_i32 = arith.constant 0 : i32
    %c0_i32_0 = arith.constant 0 : i32
    return %arg0, %c0_i32, %arg1 : i32, i32, i32
  }
}

</mosaic_0001>

<llo_original>
// kernel: tpu_custom_call.1
$region0: #{tpu_custom_call.1}
  #allocation0 [shape = 'u32[]', space=smem, size = 0x4, offset = 0x4, fixed_abs, tag = 'smem constant byte address 0x4 - core index']
  #allocation1 [shape = 'u32[144,128]{1,0:T(1,128)}', space=vmem, size = 0x12000, scoped, tag = 'internal scratch']
  %s0 = inlined_call_operand.vmem [shape: bf16[2,4,1024], index: 0, kind: input, shape index: {}]
  %s1 = inlined_call_operand.vmem [shape: bf16[64,4], index: 1, kind: input, shape index: {}]
  %s2 = inlined_call_operand.hbm [shape: bf16[2,32,1024], index: 2, kind: output, shape index: {0}]
  %s3 = inlined_call_operand.hbm [shape: bf16[2,32,1024], index: 3, kind: output, shape index: {1}]
  %4 = xla_tuple %s2, %s3
  %s5 = sld [smem:[#allocation0]]
  $region49: #{tpu_custom_call.1} parent=0
    _
  %s7 = ssub.s32 1, %s5
  %s8 = scalar_select 0, %s7, %s5
  $region1: #{tpu_custom_call.1} parent=0
    #allocation2 [shape = 'u8[32768]{0}', space=vmem, size = 0x8000, scoped, tag = 'output window, operand 0']
    #allocation3 [shape = 's32[2]{0}', space=sflag, size = 0x8, scoped, tag = 'scoped memory for tpu_custom_call.1']
    #allocation4 [shape = 'u8[32768]{0}', space=vmem, size = 0x8000, scoped, tag = 'output window, operand 1']
    #allocation5 [shape = 's32[2]{0}', space=sflag, size = 0x8, scoped, tag = 'scoped memory for tpu_custom_call.1']
    %9 = vsyncpa [#allocation3], 0
    %s10 = scalar_lea.sflag [#allocation3], 1
    %11 = vsyncpa %s10, 0
    %12 = vsyncpa [#allocation5], 0
    %s13 = scalar_lea.sflag [#allocation5], 1
    %14 = vsyncpa %s13, 0
    loop: start=0, step=1, limit=10
    $region2: #{tpu_custom_call.1} parent=1 // loop_pre_header
      _
    $region3: #{tpu_custom_call.1} parent=1 // loop_header
      %s16 = sphi 0, %s20
      %p17 = scmp.ge.s32.totalorder %s16, 10
      %s23 = sphi 0, %s35
      %s24 = sphi 0, %s31
      %s25 = sphi 0, %s23
      %s26 = sphi 0, %s24
      %s27 = sphi 0, %s25
      %s28 = sphi 0, %s26
      %s40 = sphi 0, %s42
      %s43 = sphi 0, %s40
      %s44 = sphi 0, %s43
      %s60 = sphi 0, %s44
      %s64 = sphi 0, %s64
      %s66 = sphi 0, %s64
      %s67 = sphi 0, %s66
      %s81 = sphi 0, %s67
      %s89 = sphi 0, %s91
      %s92 = sphi 0, %s89
      %s93 = sphi 0, %s92
      %s109 = sphi 0, %s93
      %s117 = sphi 0, %s119
      %s120 = sphi 0, %s117
      %s121 = sphi 0, %s120
      %s137 = sphi 0, %s121
    $region4: #{tpu_custom_call.1} parent=1 // loop_header_branch
      %19 = sbr.rel (%p17) target = $region8
    $region5: #{tpu_custom_call.1} parent=1 // loop_body
      %s21 = ssub.s32 %s16, 1
      %s22 = ssub.s32 %s16, 2
      %s29 = sadd.s32 1, %s24
      %p30 = scmp.ge.s32.totalorder %s29, 4
      %s31 = scalar_select %p30, 0, %s29
      %s32 = sadd.s32 1, %s23
      %s33 = scalar_select %p30, %s32, %s23
      %p34 = scmp.ge.s32.totalorder %s33, 2
      %s35 = scalar_select %p34, 0, %s33
      %s36 = ssub.s32 %s23, %s35
      %s37 = ssub.s32 %s24, %s31
      %s38 = sor.u32 %s36, %s37
      %p39 = scmp.eq.s32.totalorder %s38, 0
      %s41 = sadd.s32 %s40, 1
      %s42 = scalar_select %p39, %s40, %s41
      %p45 = pneg %p39
      %p46 = scmp.eq.s32.totalorder %s16, 7
      %p47 = por %p45, %p46
      %p48 = scmp.ne.s32.totalorder %s40, %s43
      %p49 = scmp.eq.s32.totalorder %s16, 0
      %p50 = por %p48, %p49
      %p51 = scmp.ne.s32.totalorder %s40, %s43
      %p52 = scmp.eq.s32.totalorder %s21, 7
      %p53 = por %p51, %p52
      %p54 = scmp.ne.s32.totalorder %s43, %s44
      %p55 = scmp.eq.s32.totalorder %s21, 0
      %p56 = por %p54, %p55
      %p57 = scmp.ne.s32.totalorder %s43, %s44
      %p58 = scmp.eq.s32.totalorder %s22, 7
      %p59 = por %p57, %p58
      %p61 = scmp.ne.s32.totalorder %s44, %s60
      %p62 = scmp.eq.s32.totalorder %s22, 0
      %p63 = por %p61, %p62
      %s65 = sadd.s32 %s64, 1
      %p68 = scmp.eq.s32.totalorder %s16, 7
      %p69 = scmp.ne.s32.totalorder %s64, %s66
      %p70 = scmp.eq.s32.totalorder %s16, 0
      %p71 = por %p69, %p70
      %p72 = scmp.ne.s32.totalorder %s64, %s66
      %p73 = scmp.eq.s32.totalorder %s21, 7
      %p74 = por %p72, %p73
      %p75 = scmp.ne.s32.totalorder %s66, %s67
      %p76 = scmp.eq.s32.totalorder %s21, 0
      %p77 = por %p75, %p76
      %p78 = scmp.ne.s32.totalorder %s66, %s67
      %p79 = scmp.eq.s32.totalorder %s22, 7
      %p80 = por %p78, %p79
      %p82 = scmp.ne.s32.totalorder %s67, %s81
      %p83 = scmp.eq.s32.totalorder %s22, 0
      %p84 = por %p82, %p83
      %s85 = ssub.s32 %s23, %s35
      %s86 = ssub.s32 %s24, %s31
      %s87 = sor.u32 %s85, %s86
      %p88 = scmp.eq.s32.totalorder %s87, 0
      %s90 = sadd.s32 %s89, 1
      %s91 = scalar_select %p88, %s89, %s90
      %p94 = pneg %p88
      %p95 = scmp.eq.s32.totalorder %s16, 7
      %p96 = por %p94, %p95
      %p97 = scmp.ne.s32.totalorder %s89, %s92
      %p98 = scmp.eq.s32.totalorder %s16, 0
      %p99 = por %p97, %p98
      %p100 = scmp.ne.s32.totalorder %s89, %s92
      %p101 = scmp.eq.s32.totalorder %s21, 7
      %p102 = por %p100, %p101
      %p103 = scmp.ne.s32.totalorder %s92, %s93
      %p104 = scmp.eq.s32.totalorder %s21, 0
      %p105 = por %p103, %p104
      %p106 = scmp.ne.s32.totalorder %s92, %s93
      %p107 = scmp.eq.s32.totalorder %s22, 7
      %p108 = por %p106, %p107
      %p110 = scmp.ne.s32.totalorder %s93, %s109
      %p111 = scmp.eq.s32.totalorder %s22, 0
      %p112 = por %p110, %p111
      %s113 = ssub.s32 %s23, %s35
      %s114 = ssub.s32 %s24, %s31
      %s115 = sor.u32 %s113, %s114
      %p116 = scmp.eq.s32.totalorder %s115, 0
      %s118 = sadd.s32 %s117, 1
      %s119 = scalar_select %p116, %s117, %s118
      %p122 = pneg %p116
      %p123 = scmp.eq.s32.totalorder %s16, 7
      %p124 = por %p122, %p123
      %p125 = scmp.ne.s32.totalorder %s117, %s120
      %p126 = scmp.eq.s32.totalorder %s16, 0
      %p127 = por %p125, %p126
      %p128 = scmp.ne.s32.totalorder %s117, %s120
      %p129 = scmp.eq.s32.totalorder %s21, 7
      %p130 = por %p128, %p129
      %p131 = scmp.ne.s32.totalorder %s120, %s121
      %p132 = scmp.eq.s32.totalorder %s21, 0
      %p133 = por %p131, %p132
      %p134 = scmp.ne.s32.totalorder %s120, %s121
      %p135 = scmp.eq.s32.totalorder %s22, 7
      %p136 = por %p134, %p135
      %p138 = scmp.ne.s32.totalorder %s121, %s137
      %p139 = scmp.eq.s32.totalorder %s22, 0
      %p140 = por %p138, %p139
      %p141 = scmp.le.s32.totalorder 1, %s16
      %p142 = scmp.lt.s32.totalorder %s16, 9
      %p143 = pnand %p141, %p142
      %p144 = pneg %p143
      // Predicated region
      $region9: #{tpu_custom_call.1} parent=5 // pred_check
        _
      $region10: #{tpu_custom_call.1} parent=5 // pred_check_branch
        %146 = sbr.rel (%p143) target = $region12
      $region11: #{tpu_custom_call.1} parent=5 // pred_region
        %s147 = ssub.s32 %s16, 1
        // Predicated region
        $region13: #{tpu_custom_call.1} parent=11 // pred_check
          %p148 = pneg %p77
        $region14: #{tpu_custom_call.1} parent=11 // pred_check_branch
          %150 = sbr.rel (%p148) target = $region16
        $region15: #{tpu_custom_call.1} parent=11 // pred_region
          _
        $region16: #{tpu_custom_call.1} parent=11 // pred_fallthru
          _
      $region12: #{tpu_custom_call.1} parent=5 // pred_fallthru
        _
      %p151 = scmp.lt.s32.totalorder %s16, 8
      // Predicated region
      $region17: #{tpu_custom_call.1} parent=5 // pred_check
        %p152 = pneg %p151
      $region18: #{tpu_custom_call.1} parent=5 // pred_check_branch
        %154 = sbr.rel (%p152) target = $region20
      $region19: #{tpu_custom_call.1} parent=5 // pred_region
        // Predicated region
        $region21: #{tpu_custom_call.1} parent=19 // pred_check
          %p155 = pneg %p50
        $region22: #{tpu_custom_call.1} parent=19 // pred_check_branch
          %157 = sbr.rel (%p155) target = $region24
        $region23: #{tpu_custom_call.1} parent=19 // pred_region
          %s158 = smul.u32 2, %s24
          %p159 = scmp.lt.s32.totalorder %s23, 1
          %s160 = scalar_select %p159, %s23, 1
          %p161 = scmp.lt.s32.totalorder %s158, 7
          %s162 = scalar_select %p161, %s158, 7
          %s163 = smul.addr %s160, 8
          %s164 = sadd.s32 %s162, %s163
          %s165 = smul.addr %s164, 2
          %s166 = scalar_lea.vmem %s0, %s165
          %s167 = smul.u32 2, %s24
        $region24: #{tpu_custom_call.1} parent=19 // pred_fallthru
          _
      $region20: #{tpu_custom_call.1} parent=5 // pred_fallthru
        _
      %p168 = scmp.le.s32.totalorder 1, %s16
      %p169 = scmp.lt.s32.totalorder %s16, 9
      %p170 = pnand %p168, %p169
      %p171 = pneg %p170
      // Predicated region
      $region25: #{tpu_custom_call.1} parent=5 // pred_check
        _
      $region26: #{tpu_custom_call.1} parent=5 // pred_check_branch
        %173 = sbr.rel (%p170) target = $region28
      $region27: #{tpu_custom_call.1} parent=5 // pred_region
        %s174 = ssub.s32 %s16, 1
        %s175 = smul.u32 2, %s26
        %p176 = scmp.lt.s32.totalorder %s25, 1
        %s177 = scalar_select %p176, %s25, 1
        %p178 = scmp.lt.s32.totalorder %s175, 7
        %s179 = scalar_select %p178, %s175, 7
        %s180 = smul.addr %s177, 8
        %s181 = sadd.s32 %s179, %s180
        %s182 = smul.addr %s181, 2
        %s183 = scalar_lea.vmem %s0, %s182
        %p184 = pneg %p56
        %p185 = pneg %p53
        %p186 = pneg %p77
        %p187 = pneg %p74
        %p188 = pneg %p105
        %p189 = pneg %p102
        %s190 = sand.u32 %s92, 1
        %s191 = scalar_lea.sflag [#allocation3], %s190
        %s192 = sand.u32 %s92, 1
        %s193 = smul.addr %s192, 32
        %s194 = scalar_lea.vmem [#allocation2], %s193
        %p195 = pneg %p133
        %p196 = pneg %p130
        %s197 = sand.u32 %s120, 1
        %s198 = scalar_lea.sflag [#allocation5], %s197
        %s199 = sand.u32 %s120, 1
        %s200 = smul.addr %s199, 32
        %s201 = scalar_lea.vmem [#allocation4], %s200
        %s202 = smul.u32 2, %s26
        %p203 = scmp.lt.s32.totalorder %s25, 1
        %s204 = scalar_select %p203, %s25, 1
        %p205 = scmp.lt.s32.totalorder %s202, 7
        %s206 = scalar_select %p205, %s202, 7
        %s207 = smul.addr %s204, 8
        %s208 = sadd.s32 %s206, %s207
        %s209 = smul.addr %s208, 2
        %s210 = scalar_lea.vmem %s0, %s209
        %s211 = smul.u32 2, %s26
        %s212 = smul.u32 2, %s26
        %s213 = smul.u32 2, %s26
        %v215 = vld [vmem:[%s1] sm:$0xf]
        %v216 = vld [vmem:[%s1 + $0x4] sm:$0xf]
        %v217 = vld [vmem:[%s1 + $0x8] sm:$0xf]
        %v218 = vld [vmem:[%s1 + $0xc] sm:$0xf]
        %v219 = vld [vmem:[%s1 + $0x10] sm:$0xf]
        %v220 = vld [vmem:[%s1 + $0x14] sm:$0xf]
        %v221 = vld [vmem:[%s1 + $0x18] sm:$0xf]
        %v222 = vld [vmem:[%s1 + $0x1c] sm:$0xf]
        %v223 = vld [vmem:[%s210] sm:$0xf]
        %v232 = vunpack.c.l.b16 %v215
        %v233 = vunpack.c.l.b16 %v216
        %v234 = vunpack.c.l.b16 %v217
        %v235 = vunpack.c.l.b16 %v218
        %v236 = vunpack.c.l.b16 %v219
        %v237 = vunpack.c.l.b16 %v220
        %v238 = vunpack.c.l.b16 %v221
        %v239 = vunpack.c.l.b16 %v222
        %v240 = vpack.c.b16 %v233, %v232
        %v241 = vpack.c.b16 %v235, %v234
        %v242 = vpack.c.b16 %v237, %v236
        %v243 = vpack.c.b16 %v239, %v238
        %v246 = vunpack.c.l.s4 1983009808
        %v247 = vunpack.c.0.s8 %v246
        %v248 = vlaneseq
        %v249 = vshrl.u32 %v248, 7
        %v250 = vsub.s32 %v247, %v249
        %v251 = vrot.slane %v223, %v250
        %v252 = vcombine.high %v251, %v251
        %vm253 = vcmask 31744
        %v255 = vsel %vm253, %v240, 0
        %v258 = vsel %vm253, %v241, 0
        %v261 = vsel %vm253, %v242, 0
        %v264 = vsel %vm253, %v243, 0
        %vm266 = vcmask 1041408
        %v268 = vsel %vm266, %v251, 0
        %v271 = vsel %vm266, %v252, 0
        %273 = vmatprep.subr.bf16.mxu0 %v271
        %274 = vmatpush1.bf16.msra.mxu0 %v268
        %275 = vmatprep.subr.bf16.mxu0 0
        %276 = vmatpush1.bf16.msra.mxu0 0
        %277 = vmatprep.subr.bf16.mxu0 0
        %278 = vmatpush1.bf16.msra.mxu0 0
        %279 = vmatprep.subr.bf16.mxu0 0
        %280 = vmatpush1.bf16.msra.mxu0 0
        %281 = vmatprep.subr.bf16.mxu0 0
        %282 = vmatpush1.bf16.msra.mxu0 0
        %283 = vmatprep.subr.bf16.mxu0 0
        %284 = vmatpush1.bf16.msra.mxu0 0
        %285 = vmatprep.subr.bf16.mxu0 0
        %286 = vmatpush1.bf16.msra.mxu0 0
        %287 = vmatprep.subr.bf16.mxu0 0
        %288 = vmatpush1.bf16.msra.mxu0 0
        %289 = vmatprep.subr.bf16.mxu0 0
        %290 = vmatpush1.bf16.msra.mxu0 0
        %291 = vmatprep.subr.bf16.mxu0 0
        %292 = vmatpush1.bf16.msra.mxu0 0
        %293 = vmatprep.subr.bf16.mxu0 0
        %294 = vmatpush1.bf16.msra.mxu0 0
        %295 = vmatprep.subr.bf16.mxu0 0
        %296 = vmatpush1.bf16.msra.mxu0 0
        %297 = vmatprep.subr.bf16.mxu0 0
        %298 = vmatpush1.bf16.msra.mxu0 0
        %299 = vmatprep.subr.bf16.mxu0 0
        %300 = vmatpush1.bf16.msra.mxu0 0
        %301 = vmatprep.subr.bf16.mxu0 0
        %302 = vmatpush1.bf16.msra.mxu0 0
        %303 = vmatprep.subr.bf16.mxu0 0
        %304 = vmatpush1.bf16.msra.mxu0 0
        %305 = vmatprep.mubr.bf16.mxu0 0
        %306 = vmatmul.mubr.bf16.gmra.mrb[0].mxu0 %v255
        %v307 = vpop.f32.mrb[0].mxu0
        %v308 = vadd.f32 0.0, %v307
        %v309 = vpop.f32.mrb[0].mxu0
        %v310 = vadd.f32 0.0, %v309
        %v311 = vpop.f32.mrb[0].mxu0
        %v312 = vadd.f32 0.0, %v311
        %v313 = vpop.f32.mrb[0].mxu0
        %v314 = vadd.f32 0.0, %v313
        %315 = vmatprep.mubr.bf16.mxu0 0
        %316 = vmatmul.mubr.bf16.gmra.mrb[0].mxu0 %v258
        %v317 = vpop.f32.mrb[0].mxu0
        %v318 = vadd.f32 0.0, %v317
        %v319 = vpop.f32.mrb[0].mxu0
        %v320 = vadd.f32 0.0, %v319
        %v321 = vpop.f32.mrb[0].mxu0
        %v322 = vadd.f32 0.0, %v321
        %v323 = vpop.f32.mrb[0].mxu0
        %v324 = vadd.f32 0.0, %v323
        %325 = vmatprep.mubr.bf16.mxu0 0
        %326 = vmatmul.mubr.bf16.gmra.mrb[0].mxu0 %v261
        %v327 = vpop.f32.mrb[0].mxu0
        %v328 = vadd.f32 0.0, %v327
        %v329 = vpop.f32.mrb[0].mxu0
        %v330 = vadd.f32 0.0, %v329
        %v331 = vpop.f32.mrb[0].mxu0
        %v332 = vadd.f32 0.0, %v331
        %v333 = vpop.f32.mrb[0].mxu0
        %v334 = vadd.f32 0.0, %v333
        %335 = vmatprep.mubr.bf16.mxu0 0
        %336 = vmatmul.mubr.bf16.gmra.mrb[0].mxu0 %v264
        %v337 = vpop.f32.mrb[0].mxu0
        %v338 = vadd.f32 0.0, %v337
        %v339 = vpop.f32.mrb[0].mxu0
        %v340 = vadd.f32 0.0, %v339
        %v341 = vpop.f32.mrb[0].mxu0
        %v342 = vadd.f32 0.0, %v341
        %v343 = vpop.f32.mrb[0].mxu0
        %v344 = vadd.f32 0.0, %v343
        %345 = vdwg.mxu0
        %v346 = vpack.c.bf16 %v312, %v308
        %v347 = vpack.c.bf16 %v314, %v310
        %v348 = vpack.c.bf16 %v322, %v318
        %v349 = vpack.c.bf16 %v324, %v320
        %v354 = vunpack.c.l.b16 %v346
        %v355 = vunpack.c.l.b16 %v347
        %v356 = vunpack.c.h.b16 %v346
        %v357 = vunpack.c.h.b16 %v347
        %v358 = vunpack.c.l.b16 %v348
        %v359 = vunpack.c.l.b16 %v349
        %v360 = vunpack.c.h.b16 %v348
        %v361 = vunpack.c.h.b16 %v349
        %v362 = vpack.c.b16 %v355, %v354
        %v363 = vpack.c.b16 %v357, %v356
        %v364 = vpack.c.b16 %v359, %v358
        %v365 = vpack.c.b16 %v361, %v360
        %370 = vst [vmem:[%s194] sm:$0xff] %v362
        %371 = vst [vmem:[%s194 + $0x8] sm:$0xff] %v363
        %372 = vst [vmem:[%s194 + $0x10] sm:$0xff] %v364
        %373 = vst [vmem:[%s194 + $0x18] sm:$0xff] %v365
        %v374 = vpack.c.bf16 %v332, %v328
        %v375 = vpack.c.bf16 %v334, %v330
        %v376 = vpack.c.bf16 %v342, %v338
        %v377 = vpack.c.bf16 %v344, %v340
        %v382 = vunpack.c.l.b16 %v374
        %v383 = vunpack.c.l.b16 %v375
        %v384 = vunpack.c.h.b16 %v374
        %v385 = vunpack.c.h.b16 %v375
        %v386 = vunpack.c.l.b16 %v376
        %v387 = vunpack.c.l.b16 %v377
        %v388 = vunpack.c.h.b16 %v376
        %v389 = vunpack.c.h.b16 %v377
        %v390 = vpack.c.b16 %v383, %v382
        %v391 = vpack.c.b16 %v385, %v384
        %v392 = vpack.c.b16 %v387, %v386
        %v393 = vpack.c.b16 %v389, %v388
        %398 = vst [vmem:[%s201] sm:$0xff] %v390
        %399 = vst [vmem:[%s201 + $0x8] sm:$0xff] %v391
        %400 = vst [vmem:[%s201 + $0x10] sm:$0xff] %v392
        %401 = vst [vmem:[%s201 + $0x18] sm:$0xff] %v393
        %s402 = sand.u32 %s92, 1
        %s403 = scalar_lea.sflag [#allocation3], %s402
        %s404 = sand.u32 %s92, 1
        %s405 = smul.addr %s404, 32
        %s406 = scalar_lea.vmem [#allocation2], %s405
        %s407 = sand.u32 %s120, 1
        %s408 = scalar_lea.sflag [#allocation5], %s407
        %s409 = sand.u32 %s120, 1
        %s410 = smul.addr %s409, 32
        %s411 = scalar_lea.vmem [#allocation4], %s410
        // Predicated region
        $region29: #{tpu_custom_call.1} parent=27 // pred_check
          %p412 = pneg %p102
        $region30: #{tpu_custom_call.1} parent=27 // pred_check_branch
          %414 = sbr.rel (%p412) target = $region32
        $region31: #{tpu_custom_call.1} parent=27 // pred_region
          %s415 = smul.u32 2, %s26
          %s417 = ssub.s32 512, 512
          %418 = vsyncadd %s403, %s417
          %s419 = smul.addr %s25, 32
          %s420 = sadd.s32 %s415, %s419
          %s421 = smul.addr %s420, 64
          %s422 = scalar_lea.hbm %s2, %s421
          %s423 = sshll.u32 %s406, 4
          %s424 = int_to_ptr.vmem [resolvable:$true] %s423
          %429 = dma.vmem_to_hbm [thread:$0]  %s424, 512, %s422, %s403, 128, 512, 8
        $region32: #{tpu_custom_call.1} parent=27 // pred_fallthru
          _
        // Predicated region
        $region33: #{tpu_custom_call.1} parent=27 // pred_check
          %p430 = pneg %p130
        $region34: #{tpu_custom_call.1} parent=27 // pred_check_branch
          %432 = sbr.rel (%p430) target = $region36
        $region35: #{tpu_custom_call.1} parent=27 // pred_region
          %s433 = smul.u32 2, %s26
          %s435 = ssub.s32 512, 512
          %436 = vsyncadd %s408, %s435
          %s437 = smul.addr %s25, 32
          %s438 = sadd.s32 %s433, %s437
          %s439 = smul.addr %s438, 64
          %s440 = scalar_lea.hbm %s3, %s439
          %s441 = sshll.u32 %s411, 4
          %s442 = int_to_ptr.vmem [resolvable:$true] %s441
          %447 = dma.vmem_to_hbm [thread:$0]  %s442, 512, %s440, %s408, 128, 512, 8
        $region36: #{tpu_custom_call.1} parent=27 // pred_fallthru
          _
      $region28: #{tpu_custom_call.1} parent=5 // pred_fallthru
        _
      %p448 = scmp.le.s32.totalorder 2, %s16
      // Predicated region
      $region37: #{tpu_custom_call.1} parent=5 // pred_check
        %p449 = pneg %p448
      $region38: #{tpu_custom_call.1} parent=5 // pred_check_branch
        %451 = sbr.rel (%p449) target = $region40
      $region39: #{tpu_custom_call.1} parent=5 // pred_region
        %s452 = ssub.s32 %s16, 2
        // Predicated region
        $region41: #{tpu_custom_call.1} parent=39 // pred_check
          %p453 = pneg %p108
        $region42: #{tpu_custom_call.1} parent=39 // pred_check_branch
          %455 = sbr.rel (%p453) target = $region44
        $region43: #{tpu_custom_call.1} parent=39 // pred_region
          %s456 = sand.u32 %s93, 1
          %s457 = scalar_lea.sflag [#allocation3], %s456
          %s458 = sand.u32 %s93, 1
          %s459 = smul.addr %s458, 32
          %s460 = scalar_lea.vmem [#allocation2], %s459
          %461 = dma.done %s457, 512
        $region44: #{tpu_custom_call.1} parent=39 // pred_fallthru
          _
        // Predicated region
        $region45: #{tpu_custom_call.1} parent=39 // pred_check
          %p462 = pneg %p136
        $region46: #{tpu_custom_call.1} parent=39 // pred_check_branch
          %464 = sbr.rel (%p462) target = $region48
        $region47: #{tpu_custom_call.1} parent=39 // pred_region
          %s465 = sand.u32 %s121, 1
          %s466 = scalar_lea.sflag [#allocation5], %s465
          %s467 = sand.u32 %s121, 1
          %s468 = smul.addr %s467, 32
          %s469 = scalar_lea.vmem [#allocation4], %s468
          %470 = dma.done %s466, 512
        $region48: #{tpu_custom_call.1} parent=39 // pred_fallthru
          _
      $region40: #{tpu_custom_call.1} parent=5 // pred_fallthru
        _
    $region6: #{tpu_custom_call.1} parent=1 // loop_footer
      %s20 = sadd.s32 1, %s16
    $region7: #{tpu_custom_call.1} parent=1 // loop_footer_branch
      %15 = sbr.rel target = $region3
    $region8: #{tpu_custom_call.1} parent=1 // loop_exit
      _
    %471 = vsyncpa [#allocation3], 1
    %s472 = scalar_lea.sflag [#allocation3], 1
    %473 = vsyncpa %s472, 1
    %474 = vsyncpa [#allocation5], 1
    %s475 = scalar_lea.sflag [#allocation5], 1
    %476 = vsyncpa %s475, 1

</llo_original>
